<compile_context>
chip_gen: v7x
topology: tpu7x:2x2x1
jax: 0.10.0
libtpu: 0.0.40
codegen_flags: <defaults>
</compile_context>

<pallas_src>
import functools

import jax
import jax.numpy as jnp
from jax.experimental import pallas as pl
from jax.experimental.pallas import tpu as pltpu


# ----------------------------------------------------------------------------
# BN folding helpers
# ----------------------------------------------------------------------------
def fold_bn(gamma, beta, running_mean, running_var, eps=1e-5):
    scale = gamma / jnp.sqrt(running_var + eps)
    bias = beta - running_mean * scale
    return scale, bias


# ----------------------------------------------------------------------------
# Tile selection: largest divisor of H that keeps the strip scratch small and
# yields enough grid points to spread across TensorCores.
# ----------------------------------------------------------------------------
def _choose_tile_h(N, H, W, C2, p):
    bytes_per_row = max(1, (W + 2 * p) * C2 * 4)
    cap_bytes = max(1, (4 * 1024 * 1024) // bytes_per_row - 2 * p)
    cap_par = max(1, (N * H) // 8)          # aim for >= ~8 grid points when possible
    cap = max(1, min(H, cap_bytes, cap_par))
    th = 1
    for d in range(1, H + 1):
        if H % d == 0 and d <= cap:
            th = d
    if th < p:                               # halo logic needs tile_h >= p if >1 strip
        th = H
    return th


# ----------------------------------------------------------------------------
# Fused kernel: 1x1 conv (+BN1 folded) -> depthwise kxk (+BN2 folded) -> ReLU
# ----------------------------------------------------------------------------
def _lightconv_fused_kernel(x_ref, w1_ref, b1_ref, w2_ref, b2_ref, o_ref, ypad_ref,
                            *, k, p, tile_h, H, W):
    # x_ref:    (H, W, C1)              full input image for this batch element
    # w1_ref:   (C1, C2)                1x1 weight with BN1 scale folded in
    # b1_ref:   (1, C2)                 BN1 bias
    # w2_ref:   (k, k, C2)              depthwise weight with BN2 scale folded in
    # b2_ref:   (1, 1, C2)              BN2 bias
    # o_ref:    (tile_h, W, C2)         output strip
    # ypad_ref: (tile_h+2p, W+2p, C2)   f32 scratch: conv1 strip + halo, zero-padded
    s = pl.program_id(1)
    n_strips = pl.num_programs(1)
    h0 = s * tile_h
    C1 = x_ref.shape[-1]
    C2 = o_ref.shape[-1]

    w1 = w1_ref[...].astype(jnp.float32)
    b1 = b1_ref[...].astype(jnp.float32)

    def pointwise(x3d):
        # (rows, W, C1) -> (rows, W, C2) : 1x1 conv as matmul on the MXU + bias
        rows = x3d.shape[0]
        x2d = x3d.reshape(rows * W, C1).astype(jnp.float32)
        y2d = jnp.dot(x2d, w1, preferred_element_type=jnp.float32) + b1
        return y2d.reshape(rows, W, C2)

    if p > 0:
        # zero the left/right W-padding columns of the scratch
        zcol = jnp.zeros((tile_h + 2 * p, p, C2), jnp.float32)
        ypad_ref[:, :p, :] = zcol
        ypad_ref[:, p + W:, :] = zcol

        zrow = jnp.zeros((p, W, C2), jnp.float32)

        # top halo rows: recompute conv1 for image rows [h0-p, h0), zero at top edge
        @pl.when(s > 0)
        def _():
            ypad_ref[:p, p:p + W, :] = pointwise(x_ref[pl.ds(h0 - p, p)])

        @pl.when(s == 0)
        def _():
            ypad_ref[:p, p:p + W, :] = zrow

        # bottom halo rows: image rows [h0+tile_h, h0+tile_h+p), zero at bottom edge
        @pl.when(s < n_strips - 1)
        def _():
            ypad_ref[p + tile_h:, p:p + W, :] = pointwise(x_ref[pl.ds(h0 + tile_h, p)])

        @pl.when(s == n_strips - 1)
        def _():
            ypad_ref[p + tile_h:, p:p + W, :] = zrow

    # core rows of the strip
    ypad_ref[p:p + tile_h, p:p + W, :] = pointwise(x_ref[pl.ds(h0, tile_h)])

    # depthwise kxk conv (BN2 scale already folded into w2) + bias + ReLU
    acc = jnp.zeros((tile_h, W, C2), jnp.float32)
    for i in range(k):            # small static unrolled loops over the window
        for j in range(k):
            tap_w = w2_ref[i:i + 1, j:j + 1, :].astype(jnp.float32)   # (1,1,C2)
            acc = acc + ypad_ref[i:i + tile_h, j:j + W, :] * tap_w
    z = jnp.maximum(acc + b2_ref[...].astype(jnp.float32), 0.0)
    o_ref[...] = z.astype(o_ref.dtype)


def lightconv_fused(x_nhwc, w1s, b1_2d, w2s, b2_3d, *, k):
    N, H, W, C1 = x_nhwc.shape
    C2 = w1s.shape[1]
    p = k // 2
    tile_h = _choose_tile_h(N, H, W, C2, p)
    n_strips = H // tile_h

    kernel = functools.partial(_lightconv_fused_kernel,
                               k=k, p=p, tile_h=tile_h, H=H, W=W)

    # VMEM budget estimate (double-buffered blocks + scratch) -> compiler limit
    itemsize = jnp.dtype(x_nhwc.dtype).itemsize
    x_block_bytes = H * W * C1 * itemsize
    out_block_bytes = tile_h * W * C2 * itemsize
    ypad_bytes = (tile_h + 2 * p) * (W + 2 * p) * C2 * 4
    w_bytes = (C1 * C2 + C2 + k * k * C2 + C2) * 4
    vmem_bytes = 2 * x_block_bytes + 2 * out_block_bytes + ypad_bytes + 2 * w_bytes + (2 << 20)
    vmem_limit = int(min(max(vmem_bytes, 16 * 2 ** 20), 48 * 2 ** 20))

    return pl.pallas_call(
        kernel,
        out_shape=jax.ShapeDtypeStruct((N, H, W, C2), x_nhwc.dtype),
        grid_spec=pltpu.PrefetchScalarGridSpec(
            num_scalar_prefetch=0,
            grid=(N, n_strips),
            in_specs=[
                # whole image per batch element; block index constant across strips,
                # so it is DMA'd only when the batch index changes.
                pl.BlockSpec((None, H, W, C1), lambda n, s: (n, 0, 0, 0)),
                pl.BlockSpec((C1, C2), lambda n, s: (0, 0)),
                pl.BlockSpec((1, C2), lambda n, s: (0, 0)),
                pl.BlockSpec((k, k, C2), lambda n, s: (0, 0, 0)),
                pl.BlockSpec((1, 1, C2), lambda n, s: (0, 0, 0)),
            ],
            out_specs=pl.BlockSpec((None, tile_h, W, C2), lambda n, s: (n, s, 0, 0)),
            scratch_shapes=[pltpu.VMEM((tile_h + 2 * p, W + 2 * p, C2), jnp.float32)],
        ),
        compiler_params=pltpu.CompilerParams(
            dimension_semantics=("parallel", "parallel"),
            vmem_limit_bytes=vmem_limit,
        ),
    )(x_nhwc, w1s, b1_2d, w2s, b2_3d)


# ----------------------------------------------------------------------------
# LightConv wrapper (NCHW in / NCHW out, PyTorch parameter shapes)
# ----------------------------------------------------------------------------
def make_lightconv_params(key, c1, c2, k):
    """Deterministic parameter init matching PyTorch module shapes."""
    k1, k2 = jax.random.split(key, 2)
    # conv1: nn.Conv2d(c1, c2, 1, bias=False) -> weight (c2, c1, 1, 1)
    w1 = jax.random.normal(k1, (c2, c1, 1, 1), jnp.float32) * 0.1
    # conv2 (depthwise): nn.Conv2d(c2, c2, k, groups=c2, bias=False) -> (c2, 1, k, k)
    w2 = jax.random.normal(k2, (c2, 1, k, k), jnp.float32) * 0.1
    idx = jnp.arange(c2, dtype=jnp.float32)
    bn1 = dict(gamma=1.0 + 0.01 * idx, beta=0.02 * idx,
               mean=0.05 * idx, var=1.0 + 0.1 * idx)
    bn2 = dict(gamma=1.0 - 0.01 * idx, beta=-0.02 * idx,
               mean=-0.03 * idx, var=1.0 + 0.05 * idx)
    return dict(w1=w1, w2=w2, bn1=bn1, bn2=bn2)


def lightconv_forward(x_nchw, params, *, k):
    # layout: accepts NCHW, computes in NHWC, returns NCHW.
    x = jnp.transpose(x_nchw, (0, 2, 3, 1))
    C2 = params["w1"].shape[0]

    s1, b1 = fold_bn(params["bn1"]["gamma"], params["bn1"]["beta"],
                     params["bn1"]["mean"], params["bn1"]["var"])
    s2, b2 = fold_bn(params["bn2"]["gamma"], params["bn2"]["beta"],
                     params["bn2"]["mean"], params["bn2"]["var"])

    # fold BN scales into conv weights (per output channel)
    w1s = jnp.transpose(params["w1"][:, :, 0, 0], (1, 0)) * s1[None, :]            # (C1, C2)
    w2s = jnp.transpose(params["w2"][:, 0, :, :], (1, 2, 0)) * s2[None, None, :]   # (k, k, C2)

    out = lightconv_fused(
        x,
        w1s.astype(jnp.float32),
        b1.reshape(1, C2).astype(jnp.float32),
        w2s.astype(jnp.float32),
        b2.reshape(1, 1, C2).astype(jnp.float32),
        k=k,
    )
    return jnp.transpose(out, (0, 3, 1, 2))


if __name__ == "__main__":
    N, C1, H, W = 2, 4, 16, 16
    C2, K = 8, 3

    key = jax.random.PRNGKey(0)
    kx, kp = jax.random.split(key)
    x = jax.random.normal(kx, (N, C1, H, W), jnp.float32)
    params = make_lightconv_params(kp, C1, C2, K)

    out = jax.jit(functools.partial(lightconv_forward, k=K))(x, params)
    out = jax.block_until_ready(out)
    assert out.shape == (N, C2, H, W), out.shape

    # Pure-JAX reference (no Pallas), unfused BN form.
    def ref(x_nchw):
        xh = jnp.transpose(x_nchw, (0, 2, 3, 1))
        w1 = jnp.transpose(params["w1"][:, :, 0, 0], (1, 0))
        s1, b1 = fold_bn(params["bn1"]["gamma"], params["bn1"]["beta"],
                         params["bn1"]["mean"], params["bn1"]["var"])
        y = xh @ w1 * s1 + b1
        w2 = jnp.transpose(params["w2"][:, 0, :, :], (1, 2, 0))
        s2, b2 = fold_bn(params["bn2"]["gamma"], params["bn2"]["beta"],
                         params["bn2"]["mean"], params["bn2"]["var"])
        p = K // 2
        yp = jnp.pad(y, ((0, 0), (p, p), (p, p), (0, 0)))
        acc = jnp.zeros_like(y)
        for i in range(K):
            for j in range(K):
                acc = acc + yp[:, i:i + H, j:j + W, :] * w2[i, j, :]
        z = jnp.maximum(acc * s2 + b2, 0.0)
        return jnp.transpose(z, (0, 3, 1, 2))

    ref_out = ref(x)
    assert jnp.allclose(out, ref_out, atol=1e-4, rtol=1e-4), \
        float(jnp.max(jnp.abs(out - ref_out)))

    print("KERNEL_OK")
</pallas_src>

<mosaic_0001>
module attributes {stable_mosaic.version = 11 : i64} {
  func.func @_lightconv_fused_kernel(%arg0: i32, %arg1: i32, %arg2: memref<1x16x16x4xf32, #tpu.memory_space<vmem>>, %arg3: memref<4x8xf32, #tpu.memory_space<vmem>>, %arg4: memref<1x8xf32, #tpu.memory_space<vmem>>, %arg5: memref<3x3x8xf32, #tpu.memory_space<vmem>>, %arg6: memref<1x1x8xf32, #tpu.memory_space<vmem>>, %arg7: memref<1x4x16x8xf32, #tpu.memory_space<vmem>>, %arg8: memref<6x18x8xf32, #tpu.memory_space<vmem>>) attributes {dimension_semantics = [#tpu.dimension_semantics<parallel>, #tpu.dimension_semantics<parallel>], iteration_bounds = array<i64: 2, 4>, scalar_prefetch = 0 : i64, scratch_operands = 1 : i64, tpu.core_type = #tpu.core_type<tc>, window_params = [{transform_indices = @transform_0, window_bounds = array<i64: 1, 16, 16, 4>}, {pipeline_mode = #tpu.pipeline_mode<synchronous>, transform_indices = @transform_1, window_bounds = array<i64: 4, 8>}, {pipeline_mode = #tpu.pipeline_mode<synchronous>, transform_indices = @transform_2, window_bounds = array<i64: 1, 8>}, {pipeline_mode = #tpu.pipeline_mode<synchronous>, transform_indices = @transform_3, window_bounds = array<i64: 3, 3, 8>}, {pipeline_mode = #tpu.pipeline_mode<synchronous>, transform_indices = @transform_4, window_bounds = array<i64: 1, 1, 8>}, {transform_indices = @transform_5, window_bounds = array<i64: 1, 4, 16, 8>}]} {
    %c4_i32 = arith.constant 4 : i32
    %0 = arith.muli %arg1, %c4_i32 : i32
    %c0 = arith.constant 0 : index
    %c0_0 = arith.constant 0 : index
    %1 = vector.load %arg3[%c0, %c0_0] : memref<4x8xf32, #tpu.memory_space<vmem>>, vector<4x8xf32>
    %c0_1 = arith.constant 0 : index
    %c0_2 = arith.constant 0 : index
    %2 = vector.load %arg4[%c0_1, %c0_2] : memref<1x8xf32, #tpu.memory_space<vmem>>, vector<1x8xf32>
    %cst = arith.constant 0.000000e+00 : f32
    %3 = vector.broadcast %cst : f32 to vector<6x1x8xf32>
    %c0_3 = arith.constant 0 : index
    %c0_4 = arith.constant 0 : index
    %c0_5 = arith.constant 0 : index
    %4 = vector.load %arg8[%c0_3, %c0_4, %c0_5] : memref<6x18x8xf32, #tpu.memory_space<vmem>>, vector<6x1x8xf32>
    tpu.vector_store %arg8[%c0_3, %c0_4, %c0_5], %3 {strides = array<i32>} : memref<6x18x8xf32, #tpu.memory_space<vmem>>, vector<6x1x8xf32>,
    %c0_6 = arith.constant 0 : index
    %c17 = arith.constant 17 : index
    %c0_7 = arith.constant 0 : index
    %5 = vector.load %arg8[%c0_6, %c17, %c0_7] : memref<6x18x8xf32, #tpu.memory_space<vmem>>, vector<6x1x8xf32>
    tpu.vector_store %arg8[%c0_6, %c17, %c0_7], %3 {strides = array<i32>} : memref<6x18x8xf32, #tpu.memory_space<vmem>>, vector<6x1x8xf32>,
    %cst_8 = arith.constant 0.000000e+00 : f32
    %6 = vector.broadcast %cst_8 : f32 to vector<1x16x8xf32>
    %c0_i32 = arith.constant 0 : i32
    %7 = arith.cmpi sgt, %arg1, %c0_i32 : i32
    %8 = arith.extui %7 : i1 to i32
    %c0_i32_9 = arith.constant 0 : i32
    %9 = arith.cmpi ne, %8, %c0_i32_9 : i32
    scf.if %9 {
      %c1_i32 = arith.constant 1 : i32
      %82 = arith.subi %0, %c1_i32 : i32
      %c0_83 = arith.constant 0 : index
      %83 = arith.index_cast %82 : i32 to index
      %c0_84 = arith.constant 0 : index
      %c0_85 = arith.constant 0 : index
      %84 = vector.load %arg2[%c0_83, %83, %c0_84, %c0_85] : memref<1x16x16x4xf32, #tpu.memory_space<vmem>>, vector<1x1x16x4xf32>
      %85 = vector.shape_cast %84 : vector<1x1x16x4xf32> to vector<1x16x4xf32>
      %86 = vector.shape_cast %85 : vector<1x16x4xf32> to vector<16x4xf32>
      %cst_86 = arith.constant dense<0.000000e+00> : vector<16x8xf32>
      %87 = tpu.matmul %86, %1, %cst_86 {dimension_numbers = #tpu.dot_dimension_numbers<[1], [0], [0], [1], [0, 0, 1, 1], [], []>} : vector<16x4xf32>, vector<4x8xf32>, vector<16x8xf32> -> vector<16x8xf32>
      %88 = vector.broadcast %2 : vector<1x8xf32> to vector<16x8xf32>
      %89 = arith.addf %87, %88 : vector<16x8xf32>
      %90 = vector.shape_cast %89 : vector<16x8xf32> to vector<1x16x8xf32>
      %c0_87 = arith.constant 0 : index
      %c1_88 = arith.constant 1 : index
      %c0_89 = arith.constant 0 : index
      %91 = vector.load %arg8[%c0_87, %c1_88, %c0_89] : memref<6x18x8xf32, #tpu.memory_space<vmem>>, vector<1x16x8xf32>
      tpu.vector_store %arg8[%c0_87, %c1_88, %c0_89], %90 {strides = array<i32>} : memref<6x18x8xf32, #tpu.memory_space<vmem>>, vector<1x16x8xf32>,
    } else {
    }
    %c0_i32_10 = arith.constant 0 : i32
    %10 = arith.cmpi eq, %arg1, %c0_i32_10 : i32
    %11 = arith.extui %10 : i1 to i32
    %c0_i32_11 = arith.constant 0 : i32
    %12 = arith.cmpi ne, %11, %c0_i32_11 : i32
    scf.if %12 {
      %c0_83 = arith.constant 0 : index
      %c1_84 = arith.constant 1 : index
      %c0_85 = arith.constant 0 : index
      %82 = vector.load %arg8[%c0_83, %c1_84, %c0_85] : memref<6x18x8xf32, #tpu.memory_space<vmem>>, vector<1x16x8xf32>
      tpu.vector_store %arg8[%c0_83, %c1_84, %c0_85], %6 {strides = array<i32>} : memref<6x18x8xf32, #tpu.memory_space<vmem>>, vector<1x16x8xf32>,
    } else {
    }
    %c3_i32 = arith.constant 3 : i32
    %13 = arith.cmpi slt, %arg1, %c3_i32 : i32
    %14 = arith.extui %13 : i1 to i32
    %c0_i32_12 = arith.constant 0 : i32
    %15 = arith.cmpi ne, %14, %c0_i32_12 : i32
    scf.if %15 {
      %c4_i32_83 = arith.constant 4 : i32
      %82 = arith.addi %0, %c4_i32_83 : i32
      %c0_84 = arith.constant 0 : index
      %83 = arith.index_cast %82 : i32 to index
      %c0_85 = arith.constant 0 : index
      %c0_86 = arith.constant 0 : index
      %84 = vector.load %arg2[%c0_84, %83, %c0_85, %c0_86] : memref<1x16x16x4xf32, #tpu.memory_space<vmem>>, vector<1x1x16x4xf32>
      %85 = vector.shape_cast %84 : vector<1x1x16x4xf32> to vector<1x16x4xf32>
      %86 = vector.shape_cast %85 : vector<1x16x4xf32> to vector<16x4xf32>
      %cst_87 = arith.constant dense<0.000000e+00> : vector<16x8xf32>
      %87 = tpu.matmul %86, %1, %cst_87 {dimension_numbers = #tpu.dot_dimension_numbers<[1], [0], [0], [1], [0, 0, 1, 1], [], []>} : vector<16x4xf32>, vector<4x8xf32>, vector<16x8xf32> -> vector<16x8xf32>
      %88 = vector.broadcast %2 : vector<1x8xf32> to vector<16x8xf32>
      %89 = arith.addf %87, %88 : vector<16x8xf32>
      %90 = vector.shape_cast %89 : vector<16x8xf32> to vector<1x16x8xf32>
      %c5 = arith.constant 5 : index
      %c1_88 = arith.constant 1 : index
      %c0_89 = arith.constant 0 : index
      %91 = vector.load %arg8[%c5, %c1_88, %c0_89] : memref<6x18x8xf32, #tpu.memory_space<vmem>>, vector<1x16x8xf32>
      tpu.vector_store %arg8[%c5, %c1_88, %c0_89], %90 {strides = array<i32>} : memref<6x18x8xf32, #tpu.memory_space<vmem>>, vector<1x16x8xf32>,
    } else {
    }
    %c3_i32_13 = arith.constant 3 : i32
    %16 = arith.cmpi eq, %arg1, %c3_i32_13 : i32
    %17 = arith.extui %16 : i1 to i32
    %c0_i32_14 = arith.constant 0 : i32
    %18 = arith.cmpi ne, %17, %c0_i32_14 : i32
    scf.if %18 {
      %c5 = arith.constant 5 : index
      %c1_83 = arith.constant 1 : index
      %c0_84 = arith.constant 0 : index
      %82 = vector.load %arg8[%c5, %c1_83, %c0_84] : memref<6x18x8xf32, #tpu.memory_space<vmem>>, vector<1x16x8xf32>
      tpu.vector_store %arg8[%c5, %c1_83, %c0_84], %6 {strides = array<i32>} : memref<6x18x8xf32, #tpu.memory_space<vmem>>, vector<1x16x8xf32>,
    } else {
    }
    %c0_15 = arith.constant 0 : index
    %19 = arith.index_cast %0 : i32 to index
    %c0_16 = arith.constant 0 : index
    %c0_17 = arith.constant 0 : index
    %20 = vector.load %arg2[%c0_15, %19, %c0_16, %c0_17] : memref<1x16x16x4xf32, #tpu.memory_space<vmem>>, vector<1x4x16x4xf32>
    %21 = vector.shape_cast %20 : vector<1x4x16x4xf32> to vector<4x16x4xf32>
    %22 = vector.shape_cast %21 : vector<4x16x4xf32> to vector<64x4xf32>
    %cst_18 = arith.constant dense<0.000000e+00> : vector<64x8xf32>
    %23 = tpu.matmul %22, %1, %cst_18 {dimension_numbers = #tpu.dot_dimension_numbers<[1], [0], [0], [1], [0, 0, 1, 1], [], []>} : vector<64x4xf32>, vector<4x8xf32>, vector<64x8xf32> -> vector<64x8xf32>
    %24 = vector.broadcast %2 : vector<1x8xf32> to vector<64x8xf32>
    %25 = arith.addf %23, %24 : vector<64x8xf32>
    %26 = vector.shape_cast %25 : vector<64x8xf32> to vector<4x16x8xf32>
    %c1 = arith.constant 1 : index
    %c1_19 = arith.constant 1 : index
    %c0_20 = arith.constant 0 : index
    %27 = vector.load %arg8[%c1, %c1_19, %c0_20] : memref<6x18x8xf32, #tpu.memory_space<vmem>>, vector<4x16x8xf32>
    tpu.vector_store %arg8[%c1, %c1_19, %c0_20], %26 {strides = array<i32>} : memref<6x18x8xf32, #tpu.memory_space<vmem>>, vector<4x16x8xf32>,
    %cst_21 = arith.constant 0.000000e+00 : f32
    %28 = vector.broadcast %cst_21 : f32 to vector<4x16x8xf32>
    %c0_22 = arith.constant 0 : index
    %c0_23 = arith.constant 0 : index
    %c0_24 = arith.constant 0 : index
    %29 = vector.load %arg5[%c0_22, %c0_23, %c0_24] : memref<3x3x8xf32, #tpu.memory_space<vmem>>, vector<1x1x8xf32>
    %c0_25 = arith.constant 0 : index
    %c0_26 = arith.constant 0 : index
    %c0_27 = arith.constant 0 : index
    %30 = vector.load %arg8[%c0_25, %c0_26, %c0_27] : memref<6x18x8xf32, #tpu.memory_space<vmem>>, vector<4x16x8xf32>
    %31 = vector.broadcast %29 : vector<1x1x8xf32> to vector<4x16x8xf32>
    %32 = arith.mulf %30, %31 : vector<4x16x8xf32>
    %33 = arith.addf %28, %32 : vector<4x16x8xf32>
    %c0_28 = arith.constant 0 : index
    %c1_29 = arith.constant 1 : index
    %c0_30 = arith.constant 0 : index
    %34 = vector.load %arg5[%c0_28, %c1_29, %c0_30] : memref<3x3x8xf32, #tpu.memory_space<vmem>>, vector<1x1x8xf32>
    %c0_31 = arith.constant 0 : index
    %c1_32 = arith.constant 1 : index
    %c0_33 = arith.constant 0 : index
    %35 = vector.load %arg8[%c0_31, %c1_32, %c0_33] : memref<6x18x8xf32, #tpu.memory_space<vmem>>, vector<4x16x8xf32>
    %36 = vector.broadcast %34 : vector<1x1x8xf32> to vector<4x16x8xf32>
    %37 = arith.mulf %35, %36 : vector<4x16x8xf32>
    %38 = arith.addf %33, %37 : vector<4x16x8xf32>
    %c0_34 = arith.constant 0 : index
    %c2 = arith.constant 2 : index
    %c0_35 = arith.constant 0 : index
    %39 = vector.load %arg5[%c0_34, %c2, %c0_35] : memref<3x3x8xf32, #tpu.memory_space<vmem>>, vector<1x1x8xf32>
    %c0_36 = arith.constant 0 : index
    %c2_37 = arith.constant 2 : index
    %c0_38 = arith.constant 0 : index
    %40 = vector.load %arg8[%c0_36, %c2_37, %c0_38] : memref<6x18x8xf32, #tpu.memory_space<vmem>>, vector<4x16x8xf32>
    %41 = vector.broadcast %39 : vector<1x1x8xf32> to vector<4x16x8xf32>
    %42 = arith.mulf %40, %41 : vector<4x16x8xf32>
    %43 = arith.addf %38, %42 : vector<4x16x8xf32>
    %c1_39 = arith.constant 1 : index
    %c0_40 = arith.constant 0 : index
    %c0_41 = arith.constant 0 : index
    %44 = vector.load %arg5[%c1_39, %c0_40, %c0_41] : memref<3x3x8xf32, #tpu.memory_space<vmem>>, vector<1x1x8xf32>
    %c1_42 = arith.constant 1 : index
    %c0_43 = arith.constant 0 : index
    %c0_44 = arith.constant 0 : index
    %45 = vector.load %arg8[%c1_42, %c0_43, %c0_44] : memref<6x18x8xf32, #tpu.memory_space<vmem>>, vector<4x16x8xf32>
    %46 = vector.broadcast %44 : vector<1x1x8xf32> to vector<4x16x8xf32>
    %47 = arith.mulf %45, %46 : vector<4x16x8xf32>
    %48 = arith.addf %43, %47 : vector<4x16x8xf32>
    %c1_45 = arith.constant 1 : index
    %c1_46 = arith.constant 1 : index
    %c0_47 = arith.constant 0 : index
    %49 = vector.load %arg5[%c1_45, %c1_46, %c0_47] : memref<3x3x8xf32, #tpu.memory_space<vmem>>, vector<1x1x8xf32>
    %c1_48 = arith.constant 1 : index
    %c1_49 = arith.constant 1 : index
    %c0_50 = arith.constant 0 : index
    %50 = vector.load %arg8[%c1_48, %c1_49, %c0_50] : memref<6x18x8xf32, #tpu.memory_space<vmem>>, vector<4x16x8xf32>
    %51 = vector.broadcast %49 : vector<1x1x8xf32> to vector<4x16x8xf32>
    %52 = arith.mulf %50, %51 : vector<4x16x8xf32>
    %53 = arith.addf %48, %52 : vector<4x16x8xf32>
    %c1_51 = arith.constant 1 : index
    %c2_52 = arith.constant 2 : index
    %c0_53 = arith.constant 0 : index
    %54 = vector.load %arg5[%c1_51, %c2_52, %c0_53] : memref<3x3x8xf32, #tpu.memory_space<vmem>>, vector<1x1x8xf32>
    %c1_54 = arith.constant 1 : index
    %c2_55 = arith.constant 2 : index
    %c0_56 = arith.constant 0 : index
    %55 = vector.load %arg8[%c1_54, %c2_55, %c0_56] : memref<6x18x8xf32, #tpu.memory_space<vmem>>, vector<4x16x8xf32>
    %56 = vector.broadcast %54 : vector<1x1x8xf32> to vector<4x16x8xf32>
    %57 = arith.mulf %55, %56 : vector<4x16x8xf32>
    %58 = arith.addf %53, %57 : vector<4x16x8xf32>
    %c2_57 = arith.constant 2 : index
    %c0_58 = arith.constant 0 : index
    %c0_59 = arith.constant 0 : index
    %59 = vector.load %arg5[%c2_57, %c0_58, %c0_59] : memref<3x3x8xf32, #tpu.memory_space<vmem>>, vector<1x1x8xf32>
    %c2_60 = arith.constant 2 : index
    %c0_61 = arith.constant 0 : index
    %c0_62 = arith.constant 0 : index
    %60 = vector.load %arg8[%c2_60, %c0_61, %c0_62] : memref<6x18x8xf32, #tpu.memory_space<vmem>>, vector<4x16x8xf32>
    %61 = vector.broadcast %59 : vector<1x1x8xf32> to vector<4x16x8xf32>
    %62 = arith.mulf %60, %61 : vector<4x16x8xf32>
    %63 = arith.addf %58, %62 : vector<4x16x8xf32>
    %c2_63 = arith.constant 2 : index
    %c1_64 = arith.constant 1 : index
    %c0_65 = arith.constant 0 : index
    %64 = vector.load %arg5[%c2_63, %c1_64, %c0_65] : memref<3x3x8xf32, #tpu.memory_space<vmem>>, vector<1x1x8xf32>
    %c2_66 = arith.constant 2 : index
    %c1_67 = arith.constant 1 : index
    %c0_68 = arith.constant 0 : index
    %65 = vector.load %arg8[%c2_66, %c1_67, %c0_68] : memref<6x18x8xf32, #tpu.memory_space<vmem>>, vector<4x16x8xf32>
    %66 = vector.broadcast %64 : vector<1x1x8xf32> to vector<4x16x8xf32>
    %67 = arith.mulf %65, %66 : vector<4x16x8xf32>
    %68 = arith.addf %63, %67 : vector<4x16x8xf32>
    %c2_69 = arith.constant 2 : index
    %c2_70 = arith.constant 2 : index
    %c0_71 = arith.constant 0 : index
    %69 = vector.load %arg5[%c2_69, %c2_70, %c0_71] : memref<3x3x8xf32, #tpu.memory_space<vmem>>, vector<1x1x8xf32>
    %c2_72 = arith.constant 2 : index
    %c2_73 = arith.constant 2 : index
    %c0_74 = arith.constant 0 : index
    %70 = vector.load %arg8[%c2_72, %c2_73, %c0_74] : memref<6x18x8xf32, #tpu.memory_space<vmem>>, vector<4x16x8xf32>
    %71 = vector.broadcast %69 : vector<1x1x8xf32> to vector<4x16x8xf32>
    %72 = arith.mulf %70, %71 : vector<4x16x8xf32>
    %73 = arith.addf %68, %72 : vector<4x16x8xf32>
    %c0_75 = arith.constant 0 : index
    %c0_76 = arith.constant 0 : index
    %c0_77 = arith.constant 0 : index
    %74 = vector.load %arg6[%c0_75, %c0_76, %c0_77] : memref<1x1x8xf32, #tpu.memory_space<vmem>>, vector<1x1x8xf32>
    %75 = vector.broadcast %74 : vector<1x1x8xf32> to vector<4x16x8xf32>
    %76 = arith.addf %73, %75 : vector<4x16x8xf32>
    %cst_78 = arith.constant 0.000000e+00 : f32
    %77 = vector.broadcast %cst_78 : f32 to vector<4x16x8xf32>
    %78 = arith.maximumf %76, %77 : vector<4x16x8xf32>
    %c0_79 = arith.constant 0 : index
    %c0_80 = arith.constant 0 : index
    %c0_81 = arith.constant 0 : index
    %c0_82 = arith.constant 0 : index
    %79 = vector.load %arg7[%c0_79, %c0_80, %c0_81, %c0_82] : memref<1x4x16x8xf32, #tpu.memory_space<vmem>>, vector<1x4x16x8xf32>
    %80 = vector.shape_cast %79 : vector<1x4x16x8xf32> to vector<4x16x8xf32>
    %81 = vector.shape_cast %78 : vector<4x16x8xf32> to vector<1x4x16x8xf32>
    tpu.vector_store %arg7[%c0_79, %c0_80, %c0_81, %c0_82], %81 {strides = array<i32>} : memref<1x4x16x8xf32, #tpu.memory_space<vmem>>, vector<1x4x16x8xf32>,
    return
  }
  func.func @transform_0(%arg0: i32, %arg1: i32) -> (i32, i32, i32, i32) {
    %c0_i32 = arith.constant 0 : i32
    %c0_i32_0 = arith.constant 0 : i32
    %c0_i32_1 = arith.constant 0 : i32
    %c0_i32_2 = arith.constant 0 : i32
    return %arg0, %c0_i32, %c0_i32_0, %c0_i32_1 : i32, i32, i32, i32
  }
  func.func @transform_1(%arg0: i32, %arg1: i32) -> (i32, i32) {
    %c0_i32 = arith.constant 0 : i32
    %c0_i32_0 = arith.constant 0 : i32
    %c0_i32_1 = arith.constant 0 : i32
    return %c0_i32, %c0_i32_0 : i32, i32
  }
  func.func @transform_2(%arg0: i32, %arg1: i32) -> (i32, i32) {
    %c0_i32 = arith.constant 0 : i32
    %c0_i32_0 = arith.constant 0 : i32
    %c0_i32_1 = arith.constant 0 : i32
    return %c0_i32, %c0_i32_0 : i32, i32
  }
  func.func @transform_3(%arg0: i32, %arg1: i32) -> (i32, i32, i32) {
    %c0_i32 = arith.constant 0 : i32
    %c0_i32_0 = arith.constant 0 : i32
    %c0_i32_1 = arith.constant 0 : i32
    %c0_i32_2 = arith.constant 0 : i32
    return %c0_i32, %c0_i32_0, %c0_i32_1 : i32, i32, i32
  }
  func.func @transform_4(%arg0: i32, %arg1: i32) -> (i32, i32, i32) {
    %c0_i32 = arith.constant 0 : i32
    %c0_i32_0 = arith.constant 0 : i32
    %c0_i32_1 = arith.constant 0 : i32
    %c0_i32_2 = arith.constant 0 : i32
    return %c0_i32, %c0_i32_0, %c0_i32_1 : i32, i32, i32
  }
  func.func @transform_5(%arg0: i32, %arg1: i32) -> (i32, i32, i32, i32) {
    %c0_i32 = arith.constant 0 : i32
    %c0_i32_0 = arith.constant 0 : i32
    %c0_i32_1 = arith.constant 0 : i32
    return %arg0, %arg1, %c0_i32, %c0_i32_0 : i32, i32, i32, i32
  }
}

</mosaic_0001>

<llo_original>
// kernel: lightconv_forward.1
$region0: #{lightconv_forward.1}
  #allocation0 [shape = 'u32[]', space=smem, size = 0x4, offset = 0x4, fixed_abs, tag = 'smem constant byte address 0x4 - core index']
  #allocation1 [shape = 'u32[144,128]{1,0:T(1,128)}', space=vmem, size = 0x12000, scoped, tag = 'internal scratch']
  #allocation2 [shape = 'f32[6,18,8]{2,1,0:T(8,128)}', space=vmem, size = 0x12000, scoped, tag = 'scratch operand']
  %s0 = inlined_call_operand.vmem [shape: f32[2,16,16,4], index: 0, kind: input, shape index: {}]
  %s1 = inlined_call_operand.vmem [shape: f32[4,8], index: 1, kind: input, shape index: {}]
  %s2 = inlined_call_operand.vmem [shape: f32[1,8], index: 2, kind: input, shape index: {}]
  %s3 = inlined_call_operand.vmem [shape: f32[3,3,8], index: 3, kind: input, shape index: {}]
  %s4 = inlined_call_operand.vmem [shape: f32[1,1,8], index: 4, kind: input, shape index: {}]
  %s5 = inlined_call_operand.vmem [shape: f32[2,16,16,8], index: 5, kind: output, shape index: {}]
  %s6 = sld [smem:[#allocation0]]
  $region69: #{lightconv_forward.1} parent=0
    _
  %s8 = ssub.s32 1, %s6
  %s9 = scalar_select 0, %s8, %s6
  loop: start=0, step=1, limit=10
  $region2: #{lightconv_forward.1} parent=0 // loop_pre_header
    _
  $region3: #{lightconv_forward.1} parent=0 // loop_header
    %s11 = sphi 0, %s15
    %p12 = scmp.ge.s32.totalorder %s11, 10
    %s18 = sphi 0, %s30
    %s19 = sphi 0, %s26
    %s20 = sphi 0, %s18
    %s21 = sphi 0, %s19
    %s22 = sphi 0, %s20
    %s23 = sphi 0, %s21
    %s33 = sphi 0, %s35
    %s36 = sphi 0, %s33
    %s37 = sphi 0, %s36
    %s53 = sphi 0, %s37
    %s57 = sphi 0, %s57
    %s59 = sphi 0, %s57
    %s60 = sphi 0, %s59
    %s74 = sphi 0, %s60
    %s78 = sphi 0, %s78
    %s80 = sphi 0, %s78
    %s81 = sphi 0, %s80
    %s95 = sphi 0, %s81
    %s99 = sphi 0, %s99
    %s101 = sphi 0, %s99
    %s102 = sphi 0, %s101
    %s116 = sphi 0, %s102
    %s120 = sphi 0, %s120
    %s122 = sphi 0, %s120
    %s123 = sphi 0, %s122
    %s137 = sphi 0, %s123
    %s145 = sphi 0, %s147
    %s148 = sphi 0, %s145
    %s149 = sphi 0, %s148
    %s165 = sphi 0, %s149
  $region4: #{lightconv_forward.1} parent=0 // loop_header_branch
    %14 = sbr.rel (%p12) target = $region8
  $region5: #{lightconv_forward.1} parent=0 // loop_body
    %s16 = ssub.s32 %s11, 1
    %s17 = ssub.s32 %s11, 2
    %s24 = sadd.s32 1, %s19
    %p25 = scmp.ge.s32.totalorder %s24, 4
    %s26 = scalar_select %p25, 0, %s24
    %s27 = sadd.s32 1, %s18
    %s28 = scalar_select %p25, %s27, %s18
    %p29 = scmp.ge.s32.totalorder %s28, 2
    %s30 = scalar_select %p29, 0, %s28
    %s31 = ssub.s32 %s18, %s30
    %p32 = scmp.eq.s32.totalorder %s31, 0
    %s34 = sadd.s32 %s33, 1
    %s35 = scalar_select %p32, %s33, %s34
    %p38 = pneg %p32
    %p39 = scmp.eq.s32.totalorder %s11, 7
    %p40 = por %p38, %p39
    %p41 = scmp.ne.s32.totalorder %s33, %s36
    %p42 = scmp.eq.s32.totalorder %s11, 0
    %p43 = por %p41, %p42
    %p44 = scmp.ne.s32.totalorder %s33, %s36
    %p45 = scmp.eq.s32.totalorder %s16, 7
    %p46 = por %p44, %p45
    %p47 = scmp.ne.s32.totalorder %s36, %s37
    %p48 = scmp.eq.s32.totalorder %s16, 0
    %p49 = por %p47, %p48
    %p50 = scmp.ne.s32.totalorder %s36, %s37
    %p51 = scmp.eq.s32.totalorder %s17, 7
    %p52 = por %p50, %p51
    %p54 = scmp.ne.s32.totalorder %s37, %s53
    %p55 = scmp.eq.s32.totalorder %s17, 0
    %p56 = por %p54, %p55
    %s58 = sadd.s32 %s57, 1
    %p61 = scmp.eq.s32.totalorder %s11, 7
    %p62 = scmp.ne.s32.totalorder %s57, %s59
    %p63 = scmp.eq.s32.totalorder %s11, 0
    %p64 = por %p62, %p63
    %p65 = scmp.ne.s32.totalorder %s57, %s59
    %p66 = scmp.eq.s32.totalorder %s16, 7
    %p67 = por %p65, %p66
    %p68 = scmp.ne.s32.totalorder %s59, %s60
    %p69 = scmp.eq.s32.totalorder %s16, 0
    %p70 = por %p68, %p69
    %p71 = scmp.ne.s32.totalorder %s59, %s60
    %p72 = scmp.eq.s32.totalorder %s17, 7
    %p73 = por %p71, %p72
    %p75 = scmp.ne.s32.totalorder %s60, %s74
    %p76 = scmp.eq.s32.totalorder %s17, 0
    %p77 = por %p75, %p76
    %s79 = sadd.s32 %s78, 1
    %p82 = scmp.eq.s32.totalorder %s11, 7
    %p83 = scmp.ne.s32.totalorder %s78, %s80
    %p84 = scmp.eq.s32.totalorder %s11, 0
    %p85 = por %p83, %p84
    %p86 = scmp.ne.s32.totalorder %s78, %s80
    %p87 = scmp.eq.s32.totalorder %s16, 7
    %p88 = por %p86, %p87
    %p89 = scmp.ne.s32.totalorder %s80, %s81
    %p90 = scmp.eq.s32.totalorder %s16, 0
    %p91 = por %p89, %p90
    %p92 = scmp.ne.s32.totalorder %s80, %s81
    %p93 = scmp.eq.s32.totalorder %s17, 7
    %p94 = por %p92, %p93
    %p96 = scmp.ne.s32.totalorder %s81, %s95
    %p97 = scmp.eq.s32.totalorder %s17, 0
    %p98 = por %p96, %p97
    %s100 = sadd.s32 %s99, 1
    %p103 = scmp.eq.s32.totalorder %s11, 7
    %p104 = scmp.ne.s32.totalorder %s99, %s101
    %p105 = scmp.eq.s32.totalorder %s11, 0
    %p106 = por %p104, %p105
    %p107 = scmp.ne.s32.totalorder %s99, %s101
    %p108 = scmp.eq.s32.totalorder %s16, 7
    %p109 = por %p107, %p108
    %p110 = scmp.ne.s32.totalorder %s101, %s102
    %p111 = scmp.eq.s32.totalorder %s16, 0
    %p112 = por %p110, %p111
    %p113 = scmp.ne.s32.totalorder %s101, %s102
    %p114 = scmp.eq.s32.totalorder %s17, 7
    %p115 = por %p113, %p114
    %p117 = scmp.ne.s32.totalorder %s102, %s116
    %p118 = scmp.eq.s32.totalorder %s17, 0
    %p119 = por %p117, %p118
    %s121 = sadd.s32 %s120, 1
    %p124 = scmp.eq.s32.totalorder %s11, 7
    %p125 = scmp.ne.s32.totalorder %s120, %s122
    %p126 = scmp.eq.s32.totalorder %s11, 0
    %p127 = por %p125, %p126
    %p128 = scmp.ne.s32.totalorder %s120, %s122
    %p129 = scmp.eq.s32.totalorder %s16, 7
    %p130 = por %p128, %p129
    %p131 = scmp.ne.s32.totalorder %s122, %s123
    %p132 = scmp.eq.s32.totalorder %s16, 0
    %p133 = por %p131, %p132
    %p134 = scmp.ne.s32.totalorder %s122, %s123
    %p135 = scmp.eq.s32.totalorder %s17, 7
    %p136 = por %p134, %p135
    %p138 = scmp.ne.s32.totalorder %s123, %s137
    %p139 = scmp.eq.s32.totalorder %s17, 0
    %p140 = por %p138, %p139
    %s141 = ssub.s32 %s18, %s30
    %s142 = ssub.s32 %s19, %s26
    %s143 = sor.u32 %s141, %s142
    %p144 = scmp.eq.s32.totalorder %s143, 0
    %s146 = sadd.s32 %s145, 1
    %s147 = scalar_select %p144, %s145, %s146
    %p150 = pneg %p144
    %p151 = scmp.eq.s32.totalorder %s11, 7
    %p152 = por %p150, %p151
    %p153 = scmp.ne.s32.totalorder %s145, %s148
    %p154 = scmp.eq.s32.totalorder %s11, 0
    %p155 = por %p153, %p154
    %p156 = scmp.ne.s32.totalorder %s145, %s148
    %p157 = scmp.eq.s32.totalorder %s16, 7
    %p158 = por %p156, %p157
    %p159 = scmp.ne.s32.totalorder %s148, %s149
    %p160 = scmp.eq.s32.totalorder %s16, 0
    %p161 = por %p159, %p160
    %p162 = scmp.ne.s32.totalorder %s148, %s149
    %p163 = scmp.eq.s32.totalorder %s17, 7
    %p164 = por %p162, %p163
    %p166 = scmp.ne.s32.totalorder %s149, %s165
    %p167 = scmp.eq.s32.totalorder %s17, 0
    %p168 = por %p166, %p167
    %p169 = scmp.le.s32.totalorder 1, %s11
    %p170 = scmp.lt.s32.totalorder %s11, 9
    %p171 = pnand %p169, %p170
    %p172 = pneg %p171
    // Predicated region
    $region9: #{lightconv_forward.1} parent=5 // pred_check
      _
    $region10: #{lightconv_forward.1} parent=5 // pred_check_branch
      %174 = sbr.rel (%p171) target = $region12
    $region11: #{lightconv_forward.1} parent=5 // pred_region
      %s175 = ssub.s32 %s11, 1
      // Predicated region
      $region13: #{lightconv_forward.1} parent=11 // pred_check
        %p176 = pneg %p70
      $region14: #{lightconv_forward.1} parent=11 // pred_check_branch
        %178 = sbr.rel (%p176) target = $region16
      $region15: #{lightconv_forward.1} parent=11 // pred_region
        _
      $region16: #{lightconv_forward.1} parent=11 // pred_fallthru
        _
      // Predicated region
      $region17: #{lightconv_forward.1} parent=11 // pred_check
        %p179 = pneg %p91
      $region18: #{lightconv_forward.1} parent=11 // pred_check_branch
        %181 = sbr.rel (%p179) target = $region20
      $region19: #{lightconv_forward.1} parent=11 // pred_region
        _
      $region20: #{lightconv_forward.1} parent=11 // pred_fallthru
        _
      // Predicated region
      $region21: #{lightconv_forward.1} parent=11 // pred_check
        %p182 = pneg %p112
      $region22: #{lightconv_forward.1} parent=11 // pred_check_branch
        %184 = sbr.rel (%p182) target = $region24
      $region23: #{lightconv_forward.1} parent=11 // pred_region
        _
      $region24: #{lightconv_forward.1} parent=11 // pred_fallthru
        _
      // Predicated region
      $region25: #{lightconv_forward.1} parent=11 // pred_check
        %p185 = pneg %p133
      $region26: #{lightconv_forward.1} parent=11 // pred_check_branch
        %187 = sbr.rel (%p185) target = $region28
      $region27: #{lightconv_forward.1} parent=11 // pred_region
        _
      $region28: #{lightconv_forward.1} parent=11 // pred_fallthru
        _
    $region12: #{lightconv_forward.1} parent=5 // pred_fallthru
      _
    %p188 = scmp.lt.s32.totalorder %s11, 8
    // Predicated region
    $region29: #{lightconv_forward.1} parent=5 // pred_check
      %p189 = pneg %p188
    $region30: #{lightconv_forward.1} parent=5 // pred_check_branch
      %191 = sbr.rel (%p189) target = $region32
    $region31: #{lightconv_forward.1} parent=5 // pred_region
      // Predicated region
      $region33: #{lightconv_forward.1} parent=31 // pred_check
        %p192 = pneg %p43
      $region34: #{lightconv_forward.1} parent=31 // pred_check_branch
        %194 = sbr.rel (%p192) target = $region36
      $region35: #{lightconv_forward.1} parent=31 // pred_region
        %p195 = scmp.lt.s32.totalorder %s18, 1
        %s196 = scalar_select %p195, %s18, 1
        %s197 = smul.addr %s196, 32
        %s198 = smul.addr %s197, 8
        %s199 = scalar_lea.vmem %s0, %s198
      $region36: #{lightconv_forward.1} parent=31 // pred_fallthru
        _
    $region32: #{lightconv_forward.1} parent=5 // pred_fallthru
      _
    %p200 = scmp.le.s32.totalorder 1, %s11
    %p201 = scmp.lt.s32.totalorder %s11, 9
    %p202 = pnand %p200, %p201
    %p203 = pneg %p202
    // Predicated region
    $region37: #{lightconv_forward.1} parent=5 // pred_check
      _
    $region38: #{lightconv_forward.1} parent=5 // pred_check_branch
      %205 = sbr.rel (%p202) target = $region40
    $region39: #{lightconv_forward.1} parent=5 // pred_region
      %s206 = ssub.s32 %s11, 1
      %p207 = scmp.lt.s32.totalorder %s20, 1
      %s208 = scalar_select %p207, %s20, 1
      %s209 = smul.addr %s208, 32
      %s210 = smul.addr %s209, 8
      %s211 = scalar_lea.vmem %s0, %s210
      %p212 = pneg %p49
      %p213 = pneg %p46
      %p214 = pneg %p70
      %p215 = pneg %p67
      %p216 = pneg %p91
      %p217 = pneg %p88
      %p218 = pneg %p112
      %p219 = pneg %p109
      %p220 = pneg %p133
      %p221 = pneg %p130
      %p222 = pneg %p161
      %p223 = pneg %p158
      %s224 = smul.u32 4, %s21
      %p225 = scmp.lt.s32.totalorder %s20, 1
      %s226 = scalar_select %p225, %s20, 1
      %p227 = scmp.lt.s32.totalorder %s224, 15
      %s228 = scalar_select %p227, %s224, 15
      %s229 = smul.addr %s228, 2
      %s230 = smul.addr %s226, 32
      %s231 = sadd.s32 %s229, %s230
      %s232 = smul.addr %s231, 8
      %s233 = scalar_lea.vmem %s5, %s232
      %p234 = scmp.lt.s32.totalorder %s20, 1
      %s235 = scalar_select %p234, %s20, 1
      %s236 = smul.addr %s235, 32
      %s237 = smul.addr %s236, 8
      %s238 = scalar_lea.vmem %s0, %s237
      %s239 = smul.u32 4, %s21
      %p240 = scmp.lt.s32.totalorder %s20, 1
      %s241 = scalar_select %p240, %s20, 1
      %p242 = scmp.lt.s32.totalorder %s239, 15
      %s243 = scalar_select %p242, %s239, 15
      %s244 = smul.addr %s243, 2
      %s245 = smul.addr %s241, 32
      %s246 = sadd.s32 %s244, %s245
      %s247 = smul.addr %s246, 8
      %s248 = scalar_lea.vmem %s5, %s247
      %s249 = smul.u32 4, %s21
      %s250 = smul.u32 %s21, 4
      %v251 = vld [vmem:[%s1] sm:$0xf]
      %v252 = vld [vmem:[%s2] sm:$0x1]
      %vm253 = vcmask 57344
      %254 = vst.msk [vmem:[#allocation2] sm:$0x1] %vm253, 0.0
      %255 = vst.msk [vmem:[#allocation2 + $0x18] sm:$0x1] %vm253, 0.0
      %256 = vst.msk [vmem:[#allocation2 + $0x30] sm:$0x1] %vm253, 0.0
      %257 = vst.msk [vmem:[#allocation2 + $0x48] sm:$0x1] %vm253, 0.0
      %258 = vst.msk [vmem:[#allocation2 + $0x60] sm:$0x1] %vm253, 0.0
      %259 = vst.msk [vmem:[#allocation2 + $0x78] sm:$0x1] %vm253, 0.0
      %260 = vst.msk [vmem:[#allocation2 + $0x11] sm:$0x1] %vm253, 0.0
      %261 = vst.msk [vmem:[#allocation2 + $0x29] sm:$0x1] %vm253, 0.0
      %262 = vst.msk [vmem:[#allocation2 + $0x41] sm:$0x1] %vm253, 0.0
      %263 = vst.msk [vmem:[#allocation2 + $0x59] sm:$0x1] %vm253, 0.0
      %264 = vst.msk [vmem:[#allocation2 + $0x71] sm:$0x1] %vm253, 0.0
      %265 = vst.msk [vmem:[#allocation2 + $0x89] sm:$0x1] %vm253, 0.0
      %p266 = scmp.gt.s32.totalorder %s21, 0
      // Predicated region
      $region41: #{lightconv_forward.1} parent=39 // pred_check
        %p267 = pneg %p266
      $region42: #{lightconv_forward.1} parent=39 // pred_check_branch
        %269 = sbr.rel (%p267) target = $region44
      $region43: #{lightconv_forward.1} parent=39 // pred_region
        %s270 = ssub.s32 %s250, 1
        %s271 = smul.u32 %s270, 16
        %s272 = scalar_lea.vmem %s238, %s271
        %v273 = vld [vmem:[%s272] sm:$0xff]
        %v274 = vld [vmem:[%s272 + $0x8] sm:$0xff]
        %v276 = vlaneseq
        %v277 = vshrl.u32 %v276, 7
        %v278 = vsub.s32 0, %v277
        %v279 = vrot.slane %v252, %v278
        %vm281 = vcmask 31744
        %v283 = vsel %vm281, %v273, 0
        %v286 = vsel %vm281, %v274, 0
        %vm288 = vcmask 1043456
        %v290 = vsel %vm288, %v251, 0
        %292 = vmatprep.subr.mxu0 0.0
        %293 = vmatpush1.msra.mxu0 %v290
        %294 = vmatprep.subr.mxu0 0.0
        %295 = vmatpush1.msra.mxu0 0.0
        %296 = vmatprep.subr.mxu0 0.0
        %297 = vmatpush1.msra.mxu0 0.0
        %298 = vmatprep.subr.mxu0 0.0
        %299 = vmatpush1.msra.mxu0 0.0
        %300 = vmatprep.subr.mxu0 0.0
        %301 = vmatpush1.msra.mxu0 0.0
        %302 = vmatprep.subr.mxu0 0.0
        %303 = vmatpush1.msra.mxu0 0.0
        %304 = vmatprep.subr.mxu0 0.0
        %305 = vmatpush1.msra.mxu0 0.0
        %306 = vmatprep.subr.mxu0 0.0
        %307 = vmatpush1.msra.mxu0 0.0
        %308 = vmatprep.subr.mxu0 0.0
        %309 = vmatpush1.msra.mxu0 0.0
        %310 = vmatprep.subr.mxu0 0.0
        %311 = vmatpush1.msra.mxu0 0.0
        %312 = vmatprep.subr.mxu0 0.0
        %313 = vmatpush1.msra.mxu0 0.0
        %314 = vmatprep.subr.mxu0 0.0
        %315 = vmatpush1.msra.mxu0 0.0
        %316 = vmatprep.subr.mxu0 0.0
        %317 = vmatpush1.msra.mxu0 0.0
        %318 = vmatprep.subr.mxu0 0.0
        %319 = vmatpush1.msra.mxu0 0.0
        %320 = vmatprep.subr.mxu0 0.0
        %321 = vmatpush1.msra.mxu0 0.0
        %322 = vmatprep.subr.mxu0 0.0
        %323 = vmatpush1.msra.mxu0 0.0
        %324 = vmatprep.subr.mxu0 0.0
        %325 = vmatpush1.msra.mxu0 0.0
        %326 = vmatprep.subr.mxu0 0.0
        %327 = vmatpush1.msra.mxu0 0.0
        %328 = vmatprep.subr.mxu0 0.0
        %329 = vmatpush1.msra.mxu0 0.0
        %330 = vmatprep.subr.mxu0 0.0
        %331 = vmatpush1.msra.mxu0 0.0
        %332 = vmatprep.subr.mxu0 0.0
        %333 = vmatpush1.msra.mxu0 0.0
        %334 = vmatprep.subr.mxu0 0.0
        %335 = vmatpush1.msra.mxu0 0.0
        %336 = vmatprep.subr.mxu0 0.0
        %337 = vmatpush1.msra.mxu0 0.0
        %338 = vmatprep.subr.mxu0 0.0
        %339 = vmatpush1.msra.mxu0 0.0
        %340 = vmatprep.subr.mxu0 0.0
        %341 = vmatpush1.msra.mxu0 0.0
        %342 = vmatprep.subr.mxu0 0.0
        %343 = vmatpush1.msra.mxu0 0.0
        %344 = vmatprep.subr.mxu0 0.0
        %345 = vmatpush1.msra.mxu0 0.0
        %346 = vmatprep.subr.mxu0 0.0
        %347 = vmatpush1.msra.mxu0 0.0
        %348 = vmatprep.subr.mxu0 0.0
        %349 = vmatpush1.msra.mxu0 0.0
        %350 = vmatprep.subr.mxu0 0.0
        %351 = vmatpush1.msra.mxu0 0.0
        %352 = vmatprep.subr.mxu0 0.0
        %353 = vmatpush1.msra.mxu0 0.0
        %354 = vmatprep.subr.mxu0 0.0
        %355 = vmatpush1.msra.mxu0 0.0
        %356 = vmatprep.mubr.f32.mxu0 0.0
        %357 = vmatmul.mubr.f32.gmra.mrb[0].mxu0 %v283
        %v358 = vpop.f32.mrb[0].mxu0
        %v359 = vadd.f32 %v279, %v358
        %v360 = vpop.f32.mrb[0].mxu0
        %361 = vmatprep.mubr.f32.mxu0 0.0
        %362 = vmatmul.mubr.f32.gmra.mrb[0].mxu0 %v286
        %v363 = vpop.f32.mrb[0].mxu0
        %v364 = vadd.f32 %v279, %v363
        %v365 = vpop.f32.mrb[0].mxu0
        %366 = vdwg.mxu0
        %vm367 = vcmask 64512
        %368 = vst.msk [vmem:[#allocation2 + $0x1] sm:$0xff] %vm367, %v359
        %369 = vst.msk [vmem:[#allocation2 + $0x9] sm:$0xff] %vm367, %v364
      $region44: #{lightconv_forward.1} parent=39 // pred_fallthru
        _
      %p370 = scmp.eq.s32.totalorder %s21, 0
      // Predicated region
      $region45: #{lightconv_forward.1} parent=39 // pred_check
        %p371 = pneg %p370
      $region46: #{lightconv_forward.1} parent=39 // pred_check_branch
        %373 = sbr.rel (%p371) target = $region48
      $region47: #{lightconv_forward.1} parent=39 // pred_region
        %vm374 = vcmask 64512
        %375 = vst.msk [vmem:[#allocation2 + $0x1] sm:$0xff] %vm374, 0.0
        %376 = vst.msk [vmem:[#allocation2 + $0x9] sm:$0xff] %vm374, 0.0
      $region48: #{lightconv_forward.1} parent=39 // pred_fallthru
        _
      %p377 = scmp.lt.s32.totalorder %s21, 3
      // Predicated region
      $region49: #{lightconv_forward.1} parent=39 // pred_check
        %p378 = pneg %p377
      $region50: #{lightconv_forward.1} parent=39 // pred_check_branch
        %380 = sbr.rel (%p378) target = $region52
      $region51: #{lightconv_forward.1} parent=39 // pred_region
        %s381 = sadd.s32 %s250, 4
        %s382 = smul.u32 %s381, 16
        %s383 = scalar_lea.vmem %s238, %s382
        %v384 = vld [vmem:[%s383] sm:$0xff]
        %v385 = vld [vmem:[%s383 + $0x8] sm:$0xff]
        %v387 = vlaneseq
        %v388 = vshrl.u32 %v387, 7
        %v389 = vsub.s32 0, %v388
        %v390 = vrot.slane %v252, %v389
        %vm392 = vcmask 31744
        %v394 = vsel %vm392, %v384, 0
        %v397 = vsel %vm392, %v385, 0
        %vm399 = vcmask 1043456
        %v401 = vsel %vm399, %v251, 0
        %403 = vmatprep.subr.mxu0 0.0
        %404 = vmatpush1.msra.mxu0 %v401
        %405 = vmatprep.subr.mxu0 0.0
        %406 = vmatpush1.msra.mxu0 0.0
        %407 = vmatprep.subr.mxu0 0.0
        %408 = vmatpush1.msra.mxu0 0.0
        %409 = vmatprep.subr.mxu0 0.0
        %410 = vmatpush1.msra.mxu0 0.0
        %411 = vmatprep.subr.mxu0 0.0
        %412 = vmatpush1.msra.mxu0 0.0
        %413 = vmatprep.subr.mxu0 0.0
        %414 = vmatpush1.msra.mxu0 0.0
        %415 = vmatprep.subr.mxu0 0.0
        %416 = vmatpush1.msra.mxu0 0.0
        %417 = vmatprep.subr.mxu0 0.0
        %418 = vmatpush1.msra.mxu0 0.0
        %419 = vmatprep.subr.mxu0 0.0
        %420 = vmatpush1.msra.mxu0 0.0
        %421 = vmatprep.subr.mxu0 0.0
        %422 = vmatpush1.msra.mxu0 0.0
        %423 = vmatprep.subr.mxu0 0.0
        %424 = vmatpush1.msra.mxu0 0.0
        %425 = vmatprep.subr.mxu0 0.0
        %426 = vmatpush1.msra.mxu0 0.0
        %427 = vmatprep.subr.mxu0 0.0
        %428 = vmatpush1.msra.mxu0 0.0
        %429 = vmatprep.subr.mxu0 0.0
        %430 = vmatpush1.msra.mxu0 0.0
        %431 = vmatprep.subr.mxu0 0.0
        %432 = vmatpush1.msra.mxu0 0.0
        %433 = vmatprep.subr.mxu0 0.0
        %434 = vmatpush1.msra.mxu0 0.0
        %435 = vmatprep.subr.mxu0 0.0
        %436 = vmatpush1.msra.mxu0 0.0
        %437 = vmatprep.subr.mxu0 0.0
        %438 = vmatpush1.msra.mxu0 0.0
        %439 = vmatprep.subr.mxu0 0.0
        %440 = vmatpush1.msra.mxu0 0.0
        %441 = vmatprep.subr.mxu0 0.0
        %442 = vmatpush1.msra.mxu0 0.0
        %443 = vmatprep.subr.mxu0 0.0
        %444 = vmatpush1.msra.mxu0 0.0
        %445 = vmatprep.subr.mxu0 0.0
        %446 = vmatpush1.msra.mxu0 0.0
        %447 = vmatprep.subr.mxu0 0.0
        %448 = vmatpush1.msra.mxu0 0.0
        %449 = vmatprep.subr.mxu0 0.0
        %450 = vmatpush1.msra.mxu0 0.0
        %451 = vmatprep.subr.mxu0 0.0
        %452 = vmatpush1.msra.mxu0 0.0
        %453 = vmatprep.subr.mxu0 0.0
        %454 = vmatpush1.msra.mxu0 0.0
        %455 = vmatprep.subr.mxu0 0.0
        %456 = vmatpush1.msra.mxu0 0.0
        %457 = vmatprep.subr.mxu0 0.0
        %458 = vmatpush1.msra.mxu0 0.0
        %459 = vmatprep.subr.mxu0 0.0
        %460 = vmatpush1.msra.mxu0 0.0
        %461 = vmatprep.subr.mxu0 0.0
        %462 = vmatpush1.msra.mxu0 0.0
        %463 = vmatprep.subr.mxu0 0.0
        %464 = vmatpush1.msra.mxu0 0.0
        %465 = vmatprep.subr.mxu0 0.0
        %466 = vmatpush1.msra.mxu0 0.0
        %467 = vmatprep.mubr.f32.mxu0 0.0
        %468 = vmatmul.mubr.f32.gmra.mrb[0].mxu0 %v394
        %v469 = vpop.f32.mrb[0].mxu0
        %v470 = vadd.f32 %v390, %v469
        %v471 = vpop.f32.mrb[0].mxu0
        %472 = vmatprep.mubr.f32.mxu0 0.0
        %473 = vmatmul.mubr.f32.gmra.mrb[0].mxu0 %v397
        %v474 = vpop.f32.mrb[0].mxu0
        %v475 = vadd.f32 %v390, %v474
        %v476 = vpop.f32.mrb[0].mxu0
        %477 = vdwg.mxu0
        %s478 = scalar_lea.vmem [#allocation2], 120
        %vm479 = vcmask 64512
        %480 = vst.msk [vmem:[%s478 + $0x1] sm:$0xff] %vm479, %v470
        %481 = vst.msk [vmem:[%s478 + $0x9] sm:$0xff] %vm479, %v475
      $region52: #{lightconv_forward.1} parent=39 // pred_fallthru
        _
      %p482 = scmp.eq.s32.totalorder %s21, 3
      // Predicated region
      $region53: #{lightconv_forward.1} parent=39 // pred_check
        %p483 = pneg %p482
      $region54: #{lightconv_forward.1} parent=39 // pred_check_branch
        %485 = sbr.rel (%p483) target = $region56
      $region55: #{lightconv_forward.1} parent=39 // pred_region
        %s486 = scalar_lea.vmem [#allocation2], 120
        %vm487 = vcmask 64512
        %488 = vst.msk [vmem:[%s486 + $0x1] sm:$0xff] %vm487, 0.0
        %489 = vst.msk [vmem:[%s486 + $0x9] sm:$0xff] %vm487, 0.0
      $region56: #{lightconv_forward.1} parent=39 // pred_fallthru
        _
      %s490 = smul.u32 %s250, 16
      %s491 = scalar_lea.vmem %s238, %s490
      %v492 = vld [vmem:[%s491] sm:$0xff]
      %v493 = vld [vmem:[%s491 + $0x8] sm:$0xff]
      %v494 = vld [vmem:[%s491 + $0x10] sm:$0xff]
      %v495 = vld [vmem:[%s491 + $0x18] sm:$0xff]
      %v496 = vld [vmem:[%s491 + $0x20] sm:$0xff]
      %v497 = vld [vmem:[%s491 + $0x28] sm:$0xff]
      %v498 = vld [vmem:[%s491 + $0x30] sm:$0xff]
      %v499 = vld [vmem:[%s491 + $0x38] sm:$0xff]
      %v501 = vlaneseq
      %v502 = vshrl.u32 %v501, 7
      %v503 = vsub.s32 0, %v502
      %v504 = vrot.slane %v252, %v503
      %vm506 = vcmask 31744
      %v508 = vsel %vm506, %v492, 0
      %v511 = vsel %vm506, %v493, 0
      %v514 = vsel %vm506, %v494, 0
      %v517 = vsel %vm506, %v495, 0
      %v520 = vsel %vm506, %v496, 0
      %v523 = vsel %vm506, %v497, 0
      %v526 = vsel %vm506, %v498, 0
      %v529 = vsel %vm506, %v499, 0
      %vm531 = vcmask 1043456
      %v533 = vsel %vm531, %v251, 0
      %535 = vmatprep.subr.mxu0 0.0
      %536 = vmatpush1.msra.mxu0 %v533
      %537 = vmatprep.subr.mxu0 0.0
      %538 = vmatpush1.msra.mxu0 0.0
      %539 = vmatprep.subr.mxu0 0.0
      %540 = vmatpush1.msra.mxu0 0.0
      %541 = vmatprep.subr.mxu0 0.0
      %542 = vmatpush1.msra.mxu0 0.0
      %543 = vmatprep.subr.mxu0 0.0
      %544 = vmatpush1.msra.mxu0 0.0
      %545 = vmatprep.subr.mxu0 0.0
      %546 = vmatpush1.msra.mxu0 0.0
      %547 = vmatprep.subr.mxu0 0.0
      %548 = vmatpush1.msra.mxu0 0.0
      %549 = vmatprep.subr.mxu0 0.0
      %550 = vmatpush1.msra.mxu0 0.0
      %551 = vmatprep.subr.mxu0 0.0
      %552 = vmatpush1.msra.mxu0 0.0
      %553 = vmatprep.subr.mxu0 0.0
      %554 = vmatpush1.msra.mxu0 0.0
      %555 = vmatprep.subr.mxu0 0.0
      %556 = vmatpush1.msra.mxu0 0.0
      %557 = vmatprep.subr.mxu0 0.0
      %558 = vmatpush1.msra.mxu0 0.0
      %559 = vmatprep.subr.mxu0 0.0
      %560 = vmatpush1.msra.mxu0 0.0
      %561 = vmatprep.subr.mxu0 0.0
      %562 = vmatpush1.msra.mxu0 0.0
      %563 = vmatprep.subr.mxu0 0.0
      %564 = vmatpush1.msra.mxu0 0.0
      %565 = vmatprep.subr.mxu0 0.0
      %566 = vmatpush1.msra.mxu0 0.0
      %567 = vmatprep.subr.mxu0 0.0
      %568 = vmatpush1.msra.mxu0 0.0
      %569 = vmatprep.subr.mxu0 0.0
      %570 = vmatpush1.msra.mxu0 0.0
      %571 = vmatprep.subr.mxu0 0.0
      %572 = vmatpush1.msra.mxu0 0.0
      %573 = vmatprep.subr.mxu0 0.0
      %574 = vmatpush1.msra.mxu0 0.0
      %575 = vmatprep.subr.mxu0 0.0
      %576 = vmatpush1.msra.mxu0 0.0
      %577 = vmatprep.subr.mxu0 0.0
      %578 = vmatpush1.msra.mxu0 0.0
      %579 = vmatprep.subr.mxu0 0.0
      %580 = vmatpush1.msra.mxu0 0.0
      %581 = vmatprep.subr.mxu0 0.0
      %582 = vmatpush1.msra.mxu0 0.0
      %583 = vmatprep.subr.mxu0 0.0
      %584 = vmatpush1.msra.mxu0 0.0
      %585 = vmatprep.subr.mxu0 0.0
      %586 = vmatpush1.msra.mxu0 0.0
      %587 = vmatprep.subr.mxu0 0.0
      %588 = vmatpush1.msra.mxu0 0.0
      %589 = vmatprep.subr.mxu0 0.0
      %590 = vmatpush1.msra.mxu0 0.0
      %591 = vmatprep.subr.mxu0 0.0
      %592 = vmatpush1.msra.mxu0 0.0
      %593 = vmatprep.subr.mxu0 0.0
      %594 = vmatpush1.msra.mxu0 0.0
      %595 = vmatprep.subr.mxu0 0.0
      %596 = vmatpush1.msra.mxu0 0.0
      %597 = vmatprep.subr.mxu0 0.0
      %598 = vmatpush1.msra.mxu0 0.0
      %599 = vmatprep.mubr.f32.mxu0 0.0
      %600 = vmatmul.mubr.f32.gmra.mrb[0].mxu0 %v508
      %v601 = vpop.f32.mrb[0].mxu0
      %v602 = vadd.f32 %v504, %v601
      %v603 = vpop.f32.mrb[0].mxu0
      %604 = vmatprep.mubr.f32.mxu0 0.0
      %605 = vmatmul.mubr.f32.gmra.mrb[0].mxu0 %v511
      %v606 = vpop.f32.mrb[0].mxu0
      %v607 = vadd.f32 %v504, %v606
      %v608 = vpop.f32.mrb[0].mxu0
      %609 = vmatprep.mubr.f32.mxu0 0.0
      %610 = vmatmul.mubr.f32.gmra.mrb[0].mxu0 %v514
      %v611 = vpop.f32.mrb[0].mxu0
      %v612 = vadd.f32 %v504, %v611
      %v613 = vpop.f32.mrb[0].mxu0
      %614 = vmatprep.mubr.f32.mxu0 0.0
      %615 = vmatmul.mubr.f32.gmra.mrb[0].mxu0 %v517
      %v616 = vpop.f32.mrb[0].mxu0
      %v617 = vadd.f32 %v504, %v616
      %v618 = vpop.f32.mrb[0].mxu0
      %619 = vmatprep.mubr.f32.mxu0 0.0
      %620 = vmatmul.mubr.f32.gmra.mrb[0].mxu0 %v520
      %v621 = vpop.f32.mrb[0].mxu0
      %v622 = vadd.f32 %v504, %v621
      %v623 = vpop.f32.mrb[0].mxu0
      %624 = vmatprep.mubr.f32.mxu0 0.0
      %625 = vmatmul.mubr.f32.gmra.mrb[0].mxu0 %v523
      %v626 = vpop.f32.mrb[0].mxu0
      %v627 = vadd.f32 %v504, %v626
      %v628 = vpop.f32.mrb[0].mxu0
      %629 = vmatprep.mubr.f32.mxu0 0.0
      %630 = vmatmul.mubr.f32.gmra.mrb[0].mxu0 %v526
      %v631 = vpop.f32.mrb[0].mxu0
      %v632 = vadd.f32 %v504, %v631
      %v633 = vpop.f32.mrb[0].mxu0
      %634 = vmatprep.mubr.f32.mxu0 0.0
      %635 = vmatmul.mubr.f32.gmra.mrb[0].mxu0 %v529
      %v636 = vpop.f32.mrb[0].mxu0
      %v637 = vadd.f32 %v504, %v636
      %v638 = vpop.f32.mrb[0].mxu0
      %639 = vdwg.mxu0
      %s640 = scalar_lea.vmem [#allocation2], 24
      %vm641 = vcmask 64512
      %642 = vst.msk [vmem:[%s640 + $0x1] sm:$0xff] %vm641, %v602
      %643 = vst.msk [vmem:[%s640 + $0x9] sm:$0xff] %vm641, %v607
      %644 = vst.msk [vmem:[%s640 + $0x19] sm:$0xff] %vm641, %v612
      %645 = vst.msk [vmem:[%s640 + $0x21] sm:$0xff] %vm641, %v617
      %646 = vst.msk [vmem:[%s640 + $0x31] sm:$0xff] %vm641, %v622
      %647 = vst.msk [vmem:[%s640 + $0x39] sm:$0xff] %vm641, %v627
      %648 = vst.msk [vmem:[%s640 + $0x49] sm:$0xff] %vm641, %v632
      %649 = vst.msk [vmem:[%s640 + $0x51] sm:$0xff] %vm641, %v637
      %v650 = vld [vmem:[%s3] sm:$0x1]
      %v651 = vld [vmem:[#allocation2] sm:$0xff]
      %v652 = vld [vmem:[#allocation2 + $0x8] sm:$0xff]
      %v653 = vld [vmem:[#allocation2 + $0x18] sm:$0xff]
      %v654 = vld [vmem:[#allocation2 + $0x20] sm:$0xff]
      %v655 = vld [vmem:[#allocation2 + $0x30] sm:$0xff]
      %v656 = vld [vmem:[#allocation2 + $0x38] sm:$0xff]
      %v657 = vld [vmem:[#allocation2 + $0x48] sm:$0xff]
      %v658 = vld [vmem:[#allocation2 + $0x50] sm:$0xff]
      %v659 = vlaneseq
      %v660 = vshrl.u32 %v659, 7
      %v661 = vsub.s32 0, %v660
      %v662 = vrot.slane %v650, %v661
      %v663 = vmul.f32 %v651, %v662
      %v664 = vmul.f32 %v652, %v662
      %v665 = vmul.f32 %v653, %v662
      %v666 = vmul.f32 %v654, %v662
      %v667 = vmul.f32 %v655, %v662
      %v668 = vmul.f32 %v656, %v662
      %v669 = vmul.f32 %v657, %v662
      %v670 = vmul.f32 %v658, %v662
      %v671 = vadd.f32 %v663, 0.0
      %v672 = vadd.f32 %v664, 0.0
      %v673 = vadd.f32 %v665, 0.0
      %v674 = vadd.f32 %v666, 0.0
      %v675 = vadd.f32 %v667, 0.0
      %v676 = vadd.f32 %v668, 0.0
      %v677 = vadd.f32 %v669, 0.0
      %v678 = vadd.f32 %v670, 0.0
      %v679 = vld [vmem:[%s3 + $0x1] sm:$0x1]
      %v680 = vld [vmem:[#allocation2 + $0x1] sm:$0xff]
      %v681 = vld [vmem:[#allocation2 + $0x9] sm:$0xff]
      %v682 = vld [vmem:[#allocation2 + $0x19] sm:$0xff]
      %v683 = vld [vmem:[#allocation2 + $0x21] sm:$0xff]
      %v684 = vld [vmem:[#allocation2 + $0x31] sm:$0xff]
      %v685 = vld [vmem:[#allocation2 + $0x39] sm:$0xff]
      %v686 = vld [vmem:[#allocation2 + $0x49] sm:$0xff]
      %v687 = vld [vmem:[#allocation2 + $0x51] sm:$0xff]
      %v688 = vlaneseq
      %v689 = vshrl.u32 %v688, 7
      %v690 = vsub.s32 0, %v689
      %v691 = vrot.slane %v679, %v690
      %v692 = vmul.f32 %v680, %v691
      %v693 = vmul.f32 %v681, %v691
      %v694 = vmul.f32 %v682, %v691
      %v695 = vmul.f32 %v683, %v691
      %v696 = vmul.f32 %v684, %v691
      %v697 = vmul.f32 %v685, %v691
      %v698 = vmul.f32 %v686, %v691
      %v699 = vmul.f32 %v687, %v691
      %v700 = vadd.f32 %v671, %v692
      %v701 = vadd.f32 %v672, %v693
      %v702 = vadd.f32 %v673, %v694
      %v703 = vadd.f32 %v674, %v695
      %v704 = vadd.f32 %v675, %v696
      %v705 = vadd.f32 %v676, %v697
      %v706 = vadd.f32 %v677, %v698
      %v707 = vadd.f32 %v678, %v699
      %v708 = vld [vmem:[%s3 + $0x2] sm:$0x1]
      %v709 = vld [vmem:[#allocation2 + $0x2] sm:$0xff]
      %v710 = vld [vmem:[#allocation2 + $0xa] sm:$0xff]
      %v711 = vld [vmem:[#allocation2 + $0x1a] sm:$0xff]
      %v712 = vld [vmem:[#allocation2 + $0x22] sm:$0xff]
      %v713 = vld [vmem:[#allocation2 + $0x32] sm:$0xff]
      %v714 = vld [vmem:[#allocation2 + $0x3a] sm:$0xff]
      %v715 = vld [vmem:[#allocation2 + $0x4a] sm:$0xff]
      %v716 = vld [vmem:[#allocation2 + $0x52] sm:$0xff]
      %v717 = vlaneseq
      %v718 = vshrl.u32 %v717, 7
      %v719 = vsub.s32 0, %v718
      %v720 = vrot.slane %v708, %v719
      %v721 = vmul.f32 %v709, %v720
      %v722 = vmul.f32 %v710, %v720
      %v723 = vmul.f32 %v711, %v720
      %v724 = vmul.f32 %v712, %v720
      %v725 = vmul.f32 %v713, %v720
      %v726 = vmul.f32 %v714, %v720
      %v727 = vmul.f32 %v715, %v720
      %v728 = vmul.f32 %v716, %v720
      %v729 = vadd.f32 %v700, %v721
      %v730 = vadd.f32 %v701, %v722
      %v731 = vadd.f32 %v702, %v723
      %v732 = vadd.f32 %v703, %v724
      %v733 = vadd.f32 %v704, %v725
      %v734 = vadd.f32 %v705, %v726
      %v735 = vadd.f32 %v706, %v727
      %v736 = vadd.f32 %v707, %v728
      %s737 = scalar_lea.vmem %s3, 4
      %v738 = vld [vmem:[%s737] sm:$0x1]
      %v739 = vld [vmem:[%s640] sm:$0xff]
      %v740 = vld [vmem:[%s640 + $0x8] sm:$0xff]
      %v741 = vld [vmem:[%s640 + $0x18] sm:$0xff]
      %v742 = vld [vmem:[%s640 + $0x20] sm:$0xff]
      %v743 = vld [vmem:[%s640 + $0x30] sm:$0xff]
      %v744 = vld [vmem:[%s640 + $0x38] sm:$0xff]
      %v745 = vld [vmem:[%s640 + $0x48] sm:$0xff]
      %v746 = vld [vmem:[%s640 + $0x50] sm:$0xff]
      %v747 = vlaneseq
      %v748 = vshrl.u32 %v747, 7
      %v749 = vsub.s32 0, %v748
      %v750 = vrot.slane %v738, %v749
      %v751 = vmul.f32 %v739, %v750
      %v752 = vmul.f32 %v740, %v750
      %v753 = vmul.f32 %v741, %v750
      %v754 = vmul.f32 %v742, %v750
      %v755 = vmul.f32 %v743, %v750
      %v756 = vmul.f32 %v744, %v750
      %v757 = vmul.f32 %v745, %v750
      %v758 = vmul.f32 %v746, %v750
      %v759 = vadd.f32 %v729, %v751
      %v760 = vadd.f32 %v730, %v752
      %v761 = vadd.f32 %v731, %v753
      %v762 = vadd.f32 %v732, %v754
      %v763 = vadd.f32 %v733, %v755
      %v764 = vadd.f32 %v734, %v756
      %v765 = vadd.f32 %v735, %v757
      %v766 = vadd.f32 %v736, %v758
      %v767 = vld [vmem:[%s737 + $0x1] sm:$0x1]
      %v768 = vld [vmem:[%s640 + $0x1] sm:$0xff]
      %v769 = vld [vmem:[%s640 + $0x9] sm:$0xff]
      %v770 = vld [vmem:[%s640 + $0x19] sm:$0xff]
      %v771 = vld [vmem:[%s640 + $0x21] sm:$0xff]
      %v772 = vld [vmem:[%s640 + $0x31] sm:$0xff]
      %v773 = vld [vmem:[%s640 + $0x39] sm:$0xff]
      %v774 = vld [vmem:[%s640 + $0x49] sm:$0xff]
      %v775 = vld [vmem:[%s640 + $0x51] sm:$0xff]
      %v776 = vlaneseq
      %v777 = vshrl.u32 %v776, 7
      %v778 = vsub.s32 0, %v777
      %v779 = vrot.slane %v767, %v778
      %v780 = vmul.f32 %v768, %v779
      %v781 = vmul.f32 %v769, %v779
      %v782 = vmul.f32 %v770, %v779
      %v783 = vmul.f32 %v771, %v779
      %v784 = vmul.f32 %v772, %v779
      %v785 = vmul.f32 %v773, %v779
      %v786 = vmul.f32 %v774, %v779
      %v787 = vmul.f32 %v775, %v779
      %v788 = vadd.f32 %v759, %v780
      %v789 = vadd.f32 %v760, %v781
      %v790 = vadd.f32 %v761, %v782
      %v791 = vadd.f32 %v762, %v783
      %v792 = vadd.f32 %v763, %v784
      %v793 = vadd.f32 %v764, %v785
      %v794 = vadd.f32 %v765, %v786
      %v795 = vadd.f32 %v766, %v787
      %v796 = vld [vmem:[%s737 + $0x2] sm:$0x1]
      %v797 = vld [vmem:[%s640 + $0x2] sm:$0xff]
      %v798 = vld [vmem:[%s640 + $0xa] sm:$0xff]
      %v799 = vld [vmem:[%s640 + $0x1a] sm:$0xff]
      %v800 = vld [vmem:[%s640 + $0x22] sm:$0xff]
      %v801 = vld [vmem:[%s640 + $0x32] sm:$0xff]
      %v802 = vld [vmem:[%s640 + $0x3a] sm:$0xff]
      %v803 = vld [vmem:[%s640 + $0x4a] sm:$0xff]
      %v804 = vld [vmem:[%s640 + $0x52] sm:$0xff]
      %v805 = vlaneseq
      %v806 = vshrl.u32 %v805, 7
      %v807 = vsub.s32 0, %v806
      %v808 = vrot.slane %v796, %v807
      %v809 = vmul.f32 %v797, %v808
      %v810 = vmul.f32 %v798, %v808
      %v811 = vmul.f32 %v799, %v808
      %v812 = vmul.f32 %v800, %v808
      %v813 = vmul.f32 %v801, %v808
      %v814 = vmul.f32 %v802, %v808
      %v815 = vmul.f32 %v803, %v808
      %v816 = vmul.f32 %v804, %v808
      %v817 = vadd.f32 %v788, %v809
      %v818 = vadd.f32 %v789, %v810
      %v819 = vadd.f32 %v790, %v811
      %v820 = vadd.f32 %v791, %v812
      %v821 = vadd.f32 %v792, %v813
      %v822 = vadd.f32 %v793, %v814
      %v823 = vadd.f32 %v794, %v815
      %v824 = vadd.f32 %v795, %v816
      %s825 = scalar_lea.vmem %s3, 8
      %v826 = vld [vmem:[%s825] sm:$0x1]
      %s827 = scalar_lea.vmem [#allocation2], 48
      %v828 = vld [vmem:[%s827] sm:$0xff]
      %v829 = vld [vmem:[%s827 + $0x8] sm:$0xff]
      %v830 = vld [vmem:[%s827 + $0x18] sm:$0xff]
      %v831 = vld [vmem:[%s827 + $0x20] sm:$0xff]
      %v832 = vld [vmem:[%s827 + $0x30] sm:$0xff]
      %v833 = vld [vmem:[%s827 + $0x38] sm:$0xff]
      %v834 = vld [vmem:[%s827 + $0x48] sm:$0xff]
      %v835 = vld [vmem:[%s827 + $0x50] sm:$0xff]
      %v836 = vlaneseq
      %v837 = vshrl.u32 %v836, 7
      %v838 = vsub.s32 0, %v837
      %v839 = vrot.slane %v826, %v838
      %v840 = vmul.f32 %v828, %v839
      %v841 = vmul.f32 %v829, %v839
      %v842 = vmul.f32 %v830, %v839
      %v843 = vmul.f32 %v831, %v839
      %v844 = vmul.f32 %v832, %v839
      %v845 = vmul.f32 %v833, %v839
      %v846 = vmul.f32 %v834, %v839
      %v847 = vmul.f32 %v835, %v839
      %v848 = vadd.f32 %v817, %v840
      %v849 = vadd.f32 %v818, %v841
      %v850 = vadd.f32 %v819, %v842
      %v851 = vadd.f32 %v820, %v843
      %v852 = vadd.f32 %v821, %v844
      %v853 = vadd.f32 %v822, %v845
      %v854 = vadd.f32 %v823, %v846
      %v855 = vadd.f32 %v824, %v847
      %v856 = vld [vmem:[%s825 + $0x1] sm:$0x1]
      %v857 = vld [vmem:[%s827 + $0x1] sm:$0xff]
      %v858 = vld [vmem:[%s827 + $0x9] sm:$0xff]
      %v859 = vld [vmem:[%s827 + $0x19] sm:$0xff]
      %v860 = vld [vmem:[%s827 + $0x21] sm:$0xff]
      %v861 = vld [vmem:[%s827 + $0x31] sm:$0xff]
      %v862 = vld [vmem:[%s827 + $0x39] sm:$0xff]
      %v863 = vld [vmem:[%s827 + $0x49] sm:$0xff]
      %v864 = vld [vmem:[%s827 + $0x51] sm:$0xff]
      %v865 = vlaneseq
      %v866 = vshrl.u32 %v865, 7
      %v867 = vsub.s32 0, %v866
      %v868 = vrot.slane %v856, %v867
      %v869 = vmul.f32 %v857, %v868
      %v870 = vmul.f32 %v858, %v868
      %v871 = vmul.f32 %v859, %v868
      %v872 = vmul.f32 %v860, %v868
      %v873 = vmul.f32 %v861, %v868
      %v874 = vmul.f32 %v862, %v868
      %v875 = vmul.f32 %v863, %v868
      %v876 = vmul.f32 %v864, %v868
      %v877 = vadd.f32 %v848, %v869
      %v878 = vadd.f32 %v849, %v870
      %v879 = vadd.f32 %v850, %v871
      %v880 = vadd.f32 %v851, %v872
      %v881 = vadd.f32 %v852, %v873
      %v882 = vadd.f32 %v853, %v874
      %v883 = vadd.f32 %v854, %v875
      %v884 = vadd.f32 %v855, %v876
      %v885 = vld [vmem:[%s825 + $0x2] sm:$0x1]
      %v886 = vld [vmem:[%s827 + $0x2] sm:$0xff]
      %v887 = vld [vmem:[%s827 + $0xa] sm:$0xff]
      %v888 = vld [vmem:[%s827 + $0x1a] sm:$0xff]
      %v889 = vld [vmem:[%s827 + $0x22] sm:$0xff]
      %v890 = vld [vmem:[%s827 + $0x32] sm:$0xff]
      %v891 = vld [vmem:[%s827 + $0x3a] sm:$0xff]
      %v892 = vld [vmem:[%s827 + $0x4a] sm:$0xff]
      %v893 = vld [vmem:[%s827 + $0x52] sm:$0xff]
      %v894 = vlaneseq
      %v895 = vshrl.u32 %v894, 7
      %v896 = vsub.s32 0, %v895
      %v897 = vrot.slane %v885, %v896
      %v898 = vmul.f32 %v886, %v897
      %v899 = vmul.f32 %v887, %v897
      %v900 = vmul.f32 %v888, %v897
      %v901 = vmul.f32 %v889, %v897
      %v902 = vmul.f32 %v890, %v897
      %v903 = vmul.f32 %v891, %v897
      %v904 = vmul.f32 %v892, %v897
      %v905 = vmul.f32 %v893, %v897
      %v906 = vadd.f32 %v877, %v898
      %v907 = vadd.f32 %v878, %v899
      %v908 = vadd.f32 %v879, %v900
      %v909 = vadd.f32 %v880, %v901
      %v910 = vadd.f32 %v881, %v902
      %v911 = vadd.f32 %v882, %v903
      %v912 = vadd.f32 %v883, %v904
      %v913 = vadd.f32 %v884, %v905
      %v914 = vld [vmem:[%s4] sm:$0x1]
      %v916 = vlaneseq
      %v917 = vshrl.u32 %v916, 7
      %v918 = vsub.s32 0, %v917
      %v919 = vrot.slane %v914, %v918
      %v921 = vadd.f32 %v906, %v919
      %v922 = vadd.f32 %v907, %v919
      %v923 = vadd.f32 %v908, %v919
      %v924 = vadd.f32 %v909, %v919
      %v925 = vadd.f32 %v910, %v919
      %v926 = vadd.f32 %v911, %v919
      %v927 = vadd.f32 %v912, %v919
      %v928 = vadd.f32 %v913, %v919
      %v929 = vmax.f32 %v921, 0.0
      %v930 = vmax.f32 %v922, 0.0
      %v931 = vmax.f32 %v923, 0.0
      %v932 = vmax.f32 %v924, 0.0
      %v933 = vmax.f32 %v925, 0.0
      %v934 = vmax.f32 %v926, 0.0
      %v935 = vmax.f32 %v927, 0.0
      %v936 = vmax.f32 %v928, 0.0
      %937 = vst.msk [vmem:[%s248] sm:$0xff] %vm641, %v929
      %938 = vst.msk [vmem:[%s248 + $0x8] sm:$0xff] %vm641, %v930
      %939 = vst.msk [vmem:[%s248 + $0x10] sm:$0xff] %vm641, %v931
      %940 = vst.msk [vmem:[%s248 + $0x18] sm:$0xff] %vm641, %v932
      %941 = vst.msk [vmem:[%s248 + $0x20] sm:$0xff] %vm641, %v933
      %942 = vst.msk [vmem:[%s248 + $0x28] sm:$0xff] %vm641, %v934
      %943 = vst.msk [vmem:[%s248 + $0x30] sm:$0xff] %vm641, %v935
      %944 = vst.msk [vmem:[%s248 + $0x38] sm:$0xff] %vm641, %v936
      %s945 = smul.u32 4, %s21
      %p946 = scmp.lt.s32.totalorder %s20, 1
      %s947 = scalar_select %p946, %s20, 1
      %p948 = scmp.lt.s32.totalorder %s945, 15
      %s949 = scalar_select %p948, %s945, 15
      %s950 = smul.addr %s949, 2
      %s951 = smul.addr %s947, 32
      %s952 = sadd.s32 %s950, %s951
      %s953 = smul.addr %s952, 8
      %s954 = scalar_lea.vmem %s5, %s953
      // Predicated region
      $region57: #{lightconv_forward.1} parent=39 // pred_check
        %p955 = pneg %p158
      $region58: #{lightconv_forward.1} parent=39 // pred_check_branch
        %957 = sbr.rel (%p955) target = $region60
      $region59: #{lightconv_forward.1} parent=39 // pred_region
        %s958 = smul.u32 4, %s21
      $region60: #{lightconv_forward.1} parent=39 // pred_fallthru
        _
    $region40: #{lightconv_forward.1} parent=5 // pred_fallthru
      _
    %p959 = scmp.le.s32.totalorder 2, %s11
    // Predicated region
    $region61: #{lightconv_forward.1} parent=5 // pred_check
      %p960 = pneg %p959
    $region62: #{lightconv_forward.1} parent=5 // pred_check_branch
      %962 = sbr.rel (%p960) target = $region64
    $region63: #{lightconv_forward.1} parent=5 // pred_region
      %s963 = ssub.s32 %s11, 2
      // Predicated region
      $region65: #{lightconv_forward.1} parent=63 // pred_check
        %p964 = pneg %p164
      $region66: #{lightconv_forward.1} parent=63 // pred_check_branch
        %966 = sbr.rel (%p964) target = $region68
      $region67: #{lightconv_forward.1} parent=63 // pred_region
        %s967 = smul.u32 4, %s23
        %p968 = scmp.lt.s32.totalorder %s22, 1
        %s969 = scalar_select %p968, %s22, 1
        %p970 = scmp.lt.s32.totalorder %s967, 15
        %s971 = scalar_select %p970, %s967, 15
        %s972 = smul.addr %s971, 2
        %s973 = smul.addr %s969, 32
        %s974 = sadd.s32 %s972, %s973
        %s975 = smul.addr %s974, 8
        %s976 = scalar_lea.vmem %s5, %s975
      $region68: #{lightconv_forward.1} parent=63 // pred_fallthru
        _
    $region64: #{lightconv_forward.1} parent=5 // pred_fallthru
      _
  $region6: #{lightconv_forward.1} parent=0 // loop_footer
    %s15 = sadd.s32 1, %s11
  $region7: #{lightconv_forward.1} parent=0 // loop_footer_branch
    %10 = sbr.rel target = $region3
  $region8: #{lightconv_forward.1} parent=0 // loop_exit
    _

</llo_original>
